<compile_context>
chip_gen: v6e
topology: v6e:2x2x1
jax: 0.10.0
libtpu: 0.0.40
codegen_flags: <defaults>
</compile_context>

<pallas_src>
import functools

import jax
import jax.numpy as jnp
from jax.experimental import pallas as pl
from jax.experimental.pallas import tpu as pltpu


_LANE_CANDIDATES = (2048, 1024, 512, 256, 128)
_DEFAULT_LANE_N = 2048


def _sublane_multiple(itemsize: int) -> int:
    """Sublane packing multiple for the dtype width (f32:8, bf16:16, int8/fp8:32)."""
    return {4: 8, 2: 16, 1: 32}.get(int(itemsize), 8)


def _vmem_capacity_bytes() -> int:
    """Physical VMEM of the current TPU generation (conservative fallback)."""
    try:
        return int(pltpu.get_tpu_info().vmem_capacity_bytes)
    except Exception:
        return 64 << 20  # v7x-sized fallback: safe on every generation


def _pick_lane_n(numel: int) -> int:
    """Largest lane-dense width (multiple of 128) that divides numel, else 2048."""
    for n in _LANE_CANDIDATES:
        if numel % n == 0:
            return n
    return _DEFAULT_LANE_N


def _choose_row_tile(M, lane_n, itemsize, sub, per_operand_budget):
    """Row-tile size: sublane-rounded, budget-bounded, and split so the grid
    has >=2 steps when the whole tensor would otherwise fit in one tile
    (keeps both v7x TensorCores busy under dimension_semantics=('parallel',))."""
    if M <= sub:
        return M  # full-extent block (always legal), single trivial tile
    row_bytes = lane_n * itemsize
    budget_rows = max(sub, (per_operand_budget // max(1, row_bytes)) // sub * sub)
    max_rows = (M // sub) * sub
    if budget_rows >= M:
        half = pl.cdiv(M, 2)
        tm = pl.cdiv(half, sub) * sub
        return max(sub, min(tm, max_rows))
    return min(budget_rows, max_rows)


# ----------------------------------------------------------------------------
# Kernel: per-row-tile squared-difference, reduced over sublanes only.
# ----------------------------------------------------------------------------
def _content_sse_kernel(x_ref, t_ref, o_ref, *, tm, total_rows, ragged):
    x = x_ref[...].astype(jnp.float32)            # (tm, LANE_N)
    t = t_ref[...].astype(jnp.float32)            # (tm, LANE_N)
    d = x - t
    sq = d * d

    # Lane-dense (1, LANE_N) partial sums for this tile (sublane-only reduce).
    o_ref[...] = jnp.sum(sq, axis=0, keepdims=True)

    if ragged:
        # Only the last grid step can contain out-of-bounds rows; overwrite its
        # partial with a masked sum. Mask is built from a cheap (tm, 1) iota
        # broadcast across lanes, so full tiles pay no masking cost at all.
        i = pl.program_id(0)

        @pl.when(i == pl.num_programs(0) - 1)
        def _():
            rows = i * tm + jax.lax.broadcasted_iota(jnp.int32, (tm, 1), 0)
            masked = jnp.where(rows < total_rows, sq, 0.0)
            o_ref[...] = jnp.sum(masked, axis=0, keepdims=True)


def content_loss_forward(x, target):
    """MSE(x, target) over all elements (== F.mse_loss with 'mean' reduction)."""
    assert x.shape == target.shape, "ContentLoss requires input/target of equal shape"

    numel = 1
    for s in x.shape:
        numel *= int(s)
    numel = max(numel, 1)

    itemsize = int(jnp.dtype(x.dtype).itemsize)
    sub = _sublane_multiple(itemsize)

    # ---- Lane-dense retiling: flatten, pick LANE_N, pad tail only if needed.
    lane_n = _pick_lane_n(numel)
    M = pl.cdiv(numel, lane_n)
    padded_numel = M * lane_n

    flat_x = x.reshape(-1)
    flat_t = jnp.asarray(target, dtype=x.dtype).reshape(-1)
    if padded_numel != numel:
        pad = padded_numel - numel
        flat_x = jnp.pad(flat_x, (0, pad))        # identical zero pads on both
        flat_t = jnp.pad(flat_t, (0, pad))        # operands -> zero contribution
    xf = flat_x.reshape(M, lane_n)
    tf = flat_t.reshape(M, lane_n)

    # ---- Generation-aware tile budget and VMEM request.
    vmem_cap = _vmem_capacity_bytes()
    per_operand_budget = vmem_cap // 8            # ~16 MiB v5e/v6e, ~8 MiB v7x
    vmem_request_cap = (vmem_cap * 3) // 4        # ~96 MiB v5e/v6e, ~48 MiB v7x

    tm = _choose_row_tile(M, lane_n, itemsize, sub, per_operand_budget)
    num_tiles = pl.cdiv(M, tm)
    ragged = (M % tm) != 0

    # 2 inputs x 2 pipeline buffers x tile + output double-buffer + headroom.
    in_tile_bytes = tm * lane_n * itemsize
    out_tile_bytes = lane_n * 4
    vmem_limit = 4 * in_tile_bytes + 2 * out_tile_bytes + (4 << 20)
    vmem_limit = int(min(vmem_request_cap, max(vmem_limit, 16 << 20)))

    cost = pl.CostEstimate(
        flops=3 * numel,
        transcendentals=0,
        bytes_accessed=2 * padded_numel * itemsize + num_tiles * lane_n * 4,
    )

    partials = pl.pallas_call(
        functools.partial(_content_sse_kernel, tm=tm, total_rows=M, ragged=ragged),
        out_shape=jax.ShapeDtypeStruct((num_tiles, 1, lane_n), jnp.float32),
        grid_spec=pltpu.PrefetchScalarGridSpec(
            num_scalar_prefetch=0,
            grid=(num_tiles,),
            in_specs=[
                pl.BlockSpec((tm, lane_n), lambda i: (i, 0)),   # input tile
                pl.BlockSpec((tm, lane_n), lambda i: (i, 0)),   # target tile
            ],
            out_specs=pl.BlockSpec((None, 1, lane_n), lambda i: (i, 0, 0)),
        ),
        compiler_params=pltpu.CompilerParams(
            dimension_semantics=("parallel",),
            vmem_limit_bytes=vmem_limit,
        ),
        cost_estimate=cost,
    )(xf, tf)

    # Tiny final cross-tile / cross-lane reduction + mean scale in plain XLA.
    return jnp.sum(partials) * (1.0 / float(numel))


# ----------------------------------------------------------------------------
# Module-like wrapper mirroring the PyTorch class
# ----------------------------------------------------------------------------
class ContentLoss:
    def __init__(self, target_feature):
        # .detach() in PyTorch == treat as a constant here.
        self._target_feature = jnp.asarray(target_feature)

    def __call__(self, x):
        return content_loss_forward(x, self._target_feature)


def _reference_loss(x, target):
    """Plain-JAX reference of F.mse_loss(input, target) (mean reduction)."""
    return jnp.mean((x.astype(jnp.float32) - target.astype(jnp.float32)) ** 2)


if __name__ == "__main__":
    key = jax.random.PRNGKey(0)
    k1, k2 = jax.random.split(key)

    B, C, H, W = 2, 4, 16, 16
    x = jax.random.normal(k1, (B, C, H, W), dtype=jnp.float32)
    target_feature = jax.random.normal(k2, (B, C, H, W), dtype=jnp.float32)

    loss_mod = ContentLoss(target_feature)
    loss = jax.block_until_ready(loss_mod(x))

    ref = jax.block_until_ready(_reference_loss(x, target_feature))
    assert jnp.allclose(loss, ref, rtol=1e-5, atol=1e-6), (loss, ref)

    print("KERNEL_OK")
</pallas_src>

<mosaic_0001>
module attributes {stable_mosaic.version = 11 : i64} {
  func.func @_content_sse_kernel(%arg0: i32, %arg1: memref<1x2048xf32, #tpu.memory_space<vmem>>, %arg2: memref<1x2048xf32, #tpu.memory_space<vmem>>, %arg3: memref<1x1x2048xf32, #tpu.memory_space<vmem>>) attributes {dimension_semantics = [#tpu.dimension_semantics<parallel>], iteration_bounds = array<i64: 1>, scalar_prefetch = 0 : i64, scratch_operands = 0 : i64, tpu.core_type = #tpu.core_type<tc>, window_params = [{transform_indices = @transform_0, window_bounds = array<i64: 1, 2048>}, {transform_indices = @transform_1, window_bounds = array<i64: 1, 2048>}, {transform_indices = @transform_2, window_bounds = array<i64: 1, 1, 2048>}]} {
    %c0 = arith.constant 0 : index
    %c0_0 = arith.constant 0 : index
    %0 = vector.load %arg1[%c0, %c0_0] : memref<1x2048xf32, #tpu.memory_space<vmem>>, vector<1x2048xf32>
    %c0_1 = arith.constant 0 : index
    %c0_2 = arith.constant 0 : index
    %1 = vector.load %arg2[%c0_1, %c0_2] : memref<1x2048xf32, #tpu.memory_space<vmem>>, vector<1x2048xf32>
    %2 = arith.subf %0, %1 : vector<1x2048xf32>
    %3 = arith.mulf %2, %2 : vector<1x2048xf32>
    %cst = arith.constant dense<0.000000e+00> : vector<2048xf32>
    %4 = vector.multi_reduction <add>, %3, %cst [0] : vector<1x2048xf32> to vector<2048xf32>
    %5 = vector.shape_cast %4 : vector<2048xf32> to vector<1x2048xf32>
    %c0_3 = arith.constant 0 : index
    %c0_4 = arith.constant 0 : index
    %c0_5 = arith.constant 0 : index
    %6 = vector.load %arg3[%c0_3, %c0_4, %c0_5] : memref<1x1x2048xf32, #tpu.memory_space<vmem>>, vector<1x1x2048xf32>
    %7 = vector.shape_cast %6 : vector<1x1x2048xf32> to vector<1x2048xf32>
    %8 = vector.shape_cast %5 : vector<1x2048xf32> to vector<1x1x2048xf32>
    tpu.vector_store %arg3[%c0_3, %c0_4, %c0_5], %8 {strides = array<i32>} : memref<1x1x2048xf32, #tpu.memory_space<vmem>>, vector<1x1x2048xf32>,
    return
  }
  func.func @transform_0(%arg0: i32) -> (i32, i32) {
    %c0_i32 = arith.constant 0 : i32
    %c0_i32_0 = arith.constant 0 : i32
    return %arg0, %c0_i32 : i32, i32
  }
  func.func @transform_1(%arg0: i32) -> (i32, i32) {
    %c0_i32 = arith.constant 0 : i32
    %c0_i32_0 = arith.constant 0 : i32
    return %arg0, %c0_i32 : i32, i32
  }
  func.func @transform_2(%arg0: i32) -> (i32, i32, i32) {
    %c0_i32 = arith.constant 0 : i32
    %c0_i32_0 = arith.constant 0 : i32
    %c0_i32_1 = arith.constant 0 : i32
    return %arg0, %c0_i32, %c0_i32_0 : i32, i32, i32
  }
}

</mosaic_0001>

<llo_original>
// kernel: tpu_custom_call.1
$region0: #{tpu_custom_call.1}
  #allocation0 [shape = 'u32[]', space=smem, size = 0x4, offset = 0x4, fixed_abs, tag = 'smem constant byte address 0x4 - core index']
  #allocation1 [shape = 'u32[144,128]{1,0:T(1,128)}', space=vmem, size = 0x12000, scoped, tag = 'internal scratch']
  %s0 = inlined_call_operand.hbm [shape: f32[1,2048], index: 0, kind: input, shape index: {}]
  %s1 = inlined_call_operand.hbm [shape: f32[1,2048], index: 1, kind: input, shape index: {}]
  %s2 = inlined_call_operand.hbm [shape: f32[1,1,2048], index: 2, kind: output, shape index: {}]
  %s3 = sld [smem:[#allocation0]]
  $region26: #{tpu_custom_call.1} parent=0
    _
  %s5 = ssub.s32 1, %s3
  %s6 = scalar_select 0, %s5, %s3
  $region1: #{tpu_custom_call.1} parent=0
    #allocation2 [shape = 'u8[8192]{0}', space=vmem, size = 0x2000, scoped, tag = 'input window, operand 0, single buffered']
    #allocation3 [shape = 's32[1]{0}', space=sflag, size = 0x4, scoped, tag = 'scoped memory for tpu_custom_call.1']
    #allocation4 [shape = 's32[1]{0}', space=sflag, size = 0x4, scoped, tag = 'scoped memory for tpu_custom_call.1']
    #allocation5 [shape = 'u8[8192]{0}', space=vmem, size = 0x2000, scoped, tag = 'input window, operand 1, single buffered']
    #allocation6 [shape = 's32[1]{0}', space=sflag, size = 0x4, scoped, tag = 'scoped memory for tpu_custom_call.1']
    #allocation7 [shape = 'u8[8192]{0}', space=vmem, size = 0x2000, scoped, tag = 'output window, operand 0, single buffered']
    %7 = vsyncpa [#allocation3], 0
    %8 = vsyncpa [#allocation6], 0
    %9 = vsyncpa [#allocation4], 0
    // Predicated region
    $region2: #{tpu_custom_call.1} parent=1 // pred_check
      _
    $region3: #{tpu_custom_call.1} parent=1 // pred_check_branch
      %11 = sbr.rel (0) target = $region5
    $region4: #{tpu_custom_call.1} parent=1 // pred_region
      %s13 = ssub.s32 256, 256
      %14 = vsyncadd [#allocation3], %s13
      %s16 = sshll.u32 [#allocation2], 4
      %s17 = int_to_ptr.vmem [resolvable:$true] %s16
      %19 = dma.hbm_to_vmem [thread:$0]  %s0, 256, %s17, [#allocation3]
    $region5: #{tpu_custom_call.1} parent=1 // pred_fallthru
      _
    // Predicated region
    $region6: #{tpu_custom_call.1} parent=1 // pred_check
      _
    $region7: #{tpu_custom_call.1} parent=1 // pred_check_branch
      %21 = sbr.rel (0) target = $region9
    $region8: #{tpu_custom_call.1} parent=1 // pred_region
      %s23 = ssub.s32 256, 256
      %24 = vsyncadd [#allocation6], %s23
      %s26 = sshll.u32 [#allocation5], 4
      %s27 = int_to_ptr.vmem [resolvable:$true] %s26
      %29 = dma.hbm_to_vmem [thread:$0]  %s1, 256, %s27, [#allocation6]
    $region9: #{tpu_custom_call.1} parent=1 // pred_fallthru
      _
    // Predicated region
    $region10: #{tpu_custom_call.1} parent=1 // pred_check
      _
    $region11: #{tpu_custom_call.1} parent=1 // pred_check_branch
      %31 = sbr.rel (0) target = $region13
    $region12: #{tpu_custom_call.1} parent=1 // pred_region
      %32 = dma.done [#allocation3], 256
    $region13: #{tpu_custom_call.1} parent=1 // pred_fallthru
      _
    // Predicated region
    $region14: #{tpu_custom_call.1} parent=1 // pred_check
      _
    $region15: #{tpu_custom_call.1} parent=1 // pred_check_branch
      %34 = sbr.rel (0) target = $region17
    $region16: #{tpu_custom_call.1} parent=1 // pred_region
      %35 = dma.done [#allocation6], 256
    $region17: #{tpu_custom_call.1} parent=1 // pred_fallthru
      _
    %v36 = vld [vmem:[#allocation2] sm:$0xff]
    %v37 = vld [vmem:[#allocation2 + $0x8] sm:$0xff]
    %v38 = vld [vmem:[#allocation5] sm:$0xff]
    %v39 = vld [vmem:[#allocation5 + $0x8] sm:$0xff]
    %v40 = vsub.f32 %v36, %v38
    %v41 = vsub.f32 %v37, %v39
    %v42 = vmul.f32 %v40, %v40
    %v43 = vmul.f32 %v41, %v41
    %v44 = vadd.f32 %v42, 0.0
    %v45 = vadd.f32 %v43, 0.0
    %46 = vst [vmem:[#allocation7] sm:$0xff] %v44
    %47 = vst [vmem:[#allocation7 + $0x8] sm:$0xff] %v45
    // Predicated region
    $region18: #{tpu_custom_call.1} parent=1 // pred_check
      _
    $region19: #{tpu_custom_call.1} parent=1 // pred_check_branch
      %49 = sbr.rel (0) target = $region21
    $region20: #{tpu_custom_call.1} parent=1 // pred_region
      %s51 = ssub.s32 256, 256
      %52 = vsyncadd [#allocation4], %s51
      %s54 = sshll.u32 [#allocation7], 4
      %s55 = int_to_ptr.vmem [resolvable:$true] %s54
      %57 = dma.vmem_to_hbm [thread:$0]  %s55, 256, %s2, [#allocation4]
    $region21: #{tpu_custom_call.1} parent=1 // pred_fallthru
      _
    // Predicated region
    $region22: #{tpu_custom_call.1} parent=1 // pred_check
      _
    $region23: #{tpu_custom_call.1} parent=1 // pred_check_branch
      %59 = sbr.rel (0) target = $region25
    $region24: #{tpu_custom_call.1} parent=1 // pred_region
      %60 = dma.done [#allocation4], 256
    $region25: #{tpu_custom_call.1} parent=1 // pred_fallthru
      _
    %61 = vsyncpa [#allocation3], 1
    %62 = vsyncpa [#allocation6], 1
    %63 = vsyncpa [#allocation4], 1

</llo_original>
